<compile_context>
chip_gen: v6e
topology: v6e:2x2x1
jax: 0.10.0
libtpu: 0.0.40
codegen_flags: <defaults>
</compile_context>

<pallas_src>
import functools
import math

import jax
import jax.numpy as jnp
from jax.experimental import pallas as pl
from jax.experimental.pallas import tpu as pltpu


def _round_up(v, m):
    return ((v + m - 1) // m) * m


def _gcn_kernel(*refs, apply_weight, has_corr, has_mask):
    it = iter(refs)
    feat_ref = next(it)                              # (1, N, d2), row-resident
    adj_ref = next(it)                               # (1, TM, N)
    dis_ref = next(it)                               # (1, TM, 1)  f32 D^{-1/2}
    corr_ref = next(it) if has_corr else None        # (1, TM, 1)  f32 loop-diag
    ftile_ref = next(it) if has_corr else None       # (1, TM, d2) feat rows
    w_ref = next(it) if apply_weight else None       # (F_pad, C_pad)
    b_ref = next(it)                                 # (1, C_pad)  f32
    mask_ref = next(it) if has_mask else None        # (1, TM, 1)  f32
    out_ref = next(it)                               # (1, TM, C_pad)

    a = adj_ref[0]                                   # (TM, N) - streams to MXU
    feat = feat_ref[0]                               # (N, d2)
    acc = jnp.dot(a, feat, preferred_element_type=jnp.float32)      # (TM, d2)

    if has_corr:
        # Self loops: adj'[i, i] = loop_val  =>
        #   acc[i] += (loop_val - adj[i, i]) * feat[i]   (rank-1 correction)
        acc = acc + corr_ref[0] * ftile_ref[0].astype(jnp.float32)

    if apply_weight:
        w = w_ref[...]
        lhs = acc if w.dtype == jnp.float32 else acc.astype(w.dtype)
        acc = jnp.dot(lhs, w, preferred_element_type=jnp.float32)   # (TM, C_pad)

    out = acc * dis_ref[0] + b_ref[...]              # row-side D^{-1/2} + bias
    if has_mask:
        out = out * mask_ref[0]                      # node mask folded in
    out_ref[0] = out.astype(out_ref.dtype)


def dense_gcn_conv(x, adj, weight, bias=None, *, mask=None, add_loop=True,
                   improved=False, row_tile=256, binary_adj_bf16=False):
    """Pallas implementation of DenseGCNConv.forward.

    Set binary_adj_bf16=True only when adj is {0,1,2}-valued (exact in bf16);
    it halves adjacency HBM traffic and runs the MXU at bf16 rate.
    """
    x = jnp.asarray(x)
    adj = jnp.asarray(adj)
    weight = jnp.asarray(weight)
    if x.ndim == 2:
        x = x[None]
    if adj.ndim == 2:
        adj = adj[None]

    B = max(x.shape[0], adj.shape[0])            # adj is batch-broadcastable
    if x.shape[0] != B:
        x = jnp.broadcast_to(x, (B,) + x.shape[1:])
    A_B, N, _ = adj.shape                        # A_B in {1, B}
    F = x.shape[-1]
    C = weight.shape[1]

    out_dtype = (jnp.bfloat16
                 if jnp.result_type(x.dtype, weight.dtype) == jnp.bfloat16
                 else jnp.float32)
    compute_dtype = (jnp.bfloat16
                     if (out_dtype == jnp.bfloat16 or binary_adj_bf16)
                     else jnp.float32)

    loop_val = (2.0 if improved else 1.0) if add_loop else None
    has_corr = add_loop
    has_mask = mask is not None

    # ---- operand widths / path selection (lane-padded comparison) ----------
    C_pad = _round_up(C, 128)
    F_pad = _round_up(F, 128)
    apply_weight = C_pad > F_pad                 # adj@(D^-1/2 x) first, then W
    d2 = F_pad if apply_weight else C_pad

    # ---- degree normalization & self-loop correction (f32, once, in XLA) ---
    adj_c = adj.astype(compute_dtype)            # exact for {0,1,2} adjacency
    deg = jnp.sum(adj_c, axis=-1, dtype=jnp.float32)                 # (A_B, N)
    if add_loop:
        diag = jnp.diagonal(adj_c, axis1=1, axis2=2).astype(jnp.float32)
        deg = deg - diag + jnp.float32(loop_val)
        corr3 = (jnp.float32(loop_val) - diag)[..., None]            # (A_B,N,1)
    else:
        corr3 = None
    dis = jax.lax.rsqrt(jnp.maximum(deg, 1.0))   # clamp(min=1) ** -0.5
    dis3 = dis[..., None]                        # (A_B, N, 1) f32

    # ---- feature operand (column-side D^{-1/2} folded in) ------------------
    # HIGHEST only for the tiny f32 X@W pre-pass (keeps f32 semantics; cost is
    # O(N*F*C) vs the kernel's O(N^2*C)); default precision for bf16 inputs.
    hoist_prec = jax.lax.Precision.HIGHEST if out_dtype == jnp.float32 else None
    if apply_weight:
        feat = (x.astype(jnp.float32) * dis3).astype(compute_dtype)  # (B,N,F)
        if F_pad != F:
            feat = jnp.pad(feat, ((0, 0), (0, 0), (0, F_pad - F)))
        w_dtype = jnp.float32 if out_dtype == jnp.float32 else compute_dtype
        w_in = weight.astype(w_dtype)
        if F_pad != F or C_pad != C:
            w_in = jnp.pad(w_in, ((0, F_pad - F), (0, C_pad - C)))
    else:
        xw = jnp.einsum('bnf,fc->bnc', x, weight, precision=hoist_prec)
        feat = (xw.astype(jnp.float32) * dis3).astype(compute_dtype)  # (B,N,C)
        if C_pad != C:
            feat = jnp.pad(feat, ((0, 0), (0, 0), (0, C_pad - C)))
        w_in = None

    if bias is None:
        b_in = jnp.zeros((1, C_pad), jnp.float32)
    else:
        b_in = jnp.asarray(bias, jnp.float32).reshape(1, C)
        if C_pad != C:
            b_in = jnp.pad(b_in, ((0, 0), (0, C_pad - C)))

    if has_mask:
        m = jnp.asarray(mask).reshape(-1, N)
        mask3 = jnp.broadcast_to(m, (B, N)).astype(jnp.float32)[..., None]
    else:
        mask3 = None

    # ---- VMEM budget & row-tile selection -----------------------------------
    try:
        cap = int(pltpu.get_tpu_info().vmem_capacity_bytes)
        vmem_limit = min(100 * 1024 * 1024, int(cap * 0.85))
    except Exception:
        vmem_limit = 54 * 1024 * 1024            # safe on v5e/v6e/v7x

    feat_b = jnp.dtype(compute_dtype).itemsize
    out_b = jnp.dtype(out_dtype).itemsize

    def _vmem_est(tm):
        rb = N * d2 * feat_b                               # resident feat (x1)
        ab = 2 * tm * N * feat_b                           # adj double-buffer
        tb = (2 * tm * d2 * feat_b) if has_corr else 0     # per-tile feat rows
        ob = 2 * tm * C_pad * out_b                        # output tiles
        sb = 2 * tm * 4 * (1 + int(has_corr) + int(has_mask))
        wb = (F_pad * C_pad * 4) if apply_weight else 0
        return rb + ab + tb + ob + sb + wb + 4 * C_pad

    TM = max(8, _round_up(min(int(row_tile), _round_up(N, 8)), 8))
    while TM > 8 and _vmem_est(TM) > int(0.8 * vmem_limit):
        TM = max(8, _round_up(TM // 2, 8))
    # Give both v7x TensorCores work when B and N are tiny.
    while B * pl.cdiv(N, TM) < 2 and TM > 8:
        TM = max(8, _round_up(TM // 2, 8))
    T = pl.cdiv(N, TM)                           # ragged last tile is fine

    if A_B > 1:
        adj_idx = lambda b, t: (b, t, 0)
    else:
        adj_idx = lambda b, t: (0, t, 0)         # shared adj: one HBM copy

    kernel = functools.partial(_gcn_kernel, apply_weight=apply_weight,
                               has_corr=has_corr, has_mask=has_mask)

    def _build_and_run(single_buffer_resident):
        def resident_spec(shape, index_map):
            if single_buffer_resident:
                return pl.BlockSpec(shape, index_map,
                                    pipeline_mode=pl.Buffered(1))
            return pl.BlockSpec(shape, index_map)

        in_specs = [
            resident_spec((1, N, d2), lambda b, t: (b, 0, 0)),   # feat, resident
            pl.BlockSpec((1, TM, N), adj_idx),                   # adj streams
            pl.BlockSpec((1, TM, 1), adj_idx),                   # dis rows
        ]
        inputs = [feat, adj_c, dis3]
        if has_corr:
            in_specs += [pl.BlockSpec((1, TM, 1), adj_idx),      # corr rows
                         pl.BlockSpec((1, TM, d2), lambda b, t: (b, t, 0))]
            inputs += [corr3, feat]                              # same HBM array
        if apply_weight:
            in_specs.append(resident_spec((F_pad, C_pad), lambda b, t: (0, 0)))
            inputs.append(w_in)
        in_specs.append(resident_spec((1, C_pad), lambda b, t: (0, 0)))
        inputs.append(b_in)
        if has_mask:
            in_specs.append(pl.BlockSpec((1, TM, 1), lambda b, t: (b, t, 0)))
            inputs.append(mask3)

        return pl.pallas_call(
            kernel,
            out_shape=jax.ShapeDtypeStruct((B, N, C_pad), out_dtype),
            grid_spec=pltpu.PrefetchScalarGridSpec(
                num_scalar_prefetch=0,
                grid=(B, T),
                in_specs=in_specs,
                out_specs=pl.BlockSpec((1, TM, C_pad), lambda b, t: (b, t, 0)),
            ),
            compiler_params=pltpu.CompilerParams(
                dimension_semantics=("parallel", "parallel"),
                vmem_limit_bytes=vmem_limit),
        )(*inputs)

    try:
        out = _build_and_run(True)
    except Exception:
        # Fallback in case single-buffered pipeline_mode is unsupported.
        out = _build_and_run(False)

    if C_pad != C:
        out = out[:, :, :C]
    return out


def _reference(x, adj, weight, bias=None, mask=None, add_loop=True,
               improved=False):
    """Pure-JAX reference mirroring the PyTorch forward."""
    hp = jax.lax.Precision.HIGHEST
    if x.ndim == 2:
        x = x[None]
    if adj.ndim == 2:
        adj = adj[None]
    B = max(x.shape[0], adj.shape[0])
    N = adj.shape[-1]
    if add_loop:
        eye = jnp.eye(N, dtype=bool)
        adj = jnp.where(eye[None], 2.0 if improved else 1.0, adj)
    out = jnp.matmul(x.astype(jnp.float32), weight.astype(jnp.float32),
                     precision=hp)
    deg_inv_sqrt = jnp.maximum(adj.astype(jnp.float32).sum(-1), 1.0) ** -0.5
    adjn = deg_inv_sqrt[..., :, None] * adj.astype(jnp.float32) \
        * deg_inv_sqrt[..., None, :]
    out = jnp.matmul(adjn, out, precision=hp)
    if bias is not None:
        out = out + bias.astype(jnp.float32)
    if mask is not None:
        m = jnp.broadcast_to(jnp.asarray(mask).reshape(-1, N), (B, N))
        out = out * m[..., None].astype(out.dtype)
    return out


def _check(name, got, ref, atol, rtol):
    err = float(jnp.max(jnp.abs(got.astype(jnp.float32) - ref)))
    ok = jnp.allclose(got.astype(jnp.float32), ref, atol=atol, rtol=rtol)
    assert ok, f"{name}: max abs err {err}"


if __name__ == "__main__":
    key = jax.random.PRNGKey(0)
    k1, k2, k3, k4, k5, k6, k7, k8, k9 = jax.random.split(key, 9)

    # Case 1: per-batch adjacency, small channels (hoisted X @ W path).
    B, N, F, C = 2, 16, 8, 32
    x1 = jax.random.normal(k1, (B, N, F), dtype=jnp.float32)
    adj1 = (jax.random.uniform(k2, (B, N, N)) > 0.5).astype(jnp.float32)
    b1 = math.sqrt(6.0 / (F + C))
    w1 = jax.random.uniform(k3, (F, C), minval=-b1, maxval=b1,
                            dtype=jnp.float32)
    bias1 = jnp.zeros((C,), dtype=jnp.float32)
    out1 = jax.block_until_ready(dense_gcn_conv(x1, adj1, w1, bias1))
    assert out1.shape == (B, N, C)
    _check("case1", out1, _reference(x1, adj1, w1, bias1), 1e-3, 1e-3)

    # Case 2: shared 2-D adjacency, improved self loops, node mask, bias.
    N2, F2, C2 = 16, 32, 8
    x2 = jax.random.normal(k4, (N2, F2), dtype=jnp.float32)
    adj2 = (jax.random.uniform(k5, (N2, N2)) > 0.5).astype(jnp.float32)
    b2 = math.sqrt(6.0 / (F2 + C2))
    w2 = jax.random.uniform(k6, (F2, C2), minval=-b2, maxval=b2,
                            dtype=jnp.float32)
    bias2 = jax.random.normal(jax.random.PRNGKey(1), (C2,), dtype=jnp.float32)
    mask2 = jnp.arange(N2)[None, :] < 12
    out2 = jax.block_until_ready(
        dense_gcn_conv(x2, adj2, w2, bias2, mask=mask2, improved=True))
    assert out2.shape == (1, N2, C2)
    _check("case2", out2,
           _reference(x2, adj2, w2, bias2, mask=mask2, improved=True),
           1e-3, 1e-3)

    # Case 3: ragged N (not a multiple of the row tile) - exercises the
    # no-adj-padding / cdiv grid / masked edge-tile path.
    N3, F3, C3 = 40, 8, 32
    x3 = jax.random.normal(k7, (1, N3, F3), dtype=jnp.float32)
    adj3 = (jax.random.uniform(k8, (1, N3, N3)) > 0.6).astype(jnp.float32)
    b3 = math.sqrt(6.0 / (F3 + C3))
    w3 = jax.random.uniform(k9, (F3, C3), minval=-b3, maxval=b3,
                            dtype=jnp.float32)
    bias3 = jax.random.normal(jax.random.PRNGKey(2), (C3,), dtype=jnp.float32)
    out3 = jax.block_until_ready(dense_gcn_conv(x3, adj3, w3, bias3))
    assert out3.shape == (1, N3, C3)
    ref3 = _reference(x3, adj3, w3, bias3)
    _check("case3", out3, ref3, 2e-3, 2e-3)

    # Case 4: same problem, bf16 adjacency/feature streaming (opt-in).
    out4 = jax.block_until_ready(
        dense_gcn_conv(x3, adj3, w3, bias3, binary_adj_bf16=True))
    _check("case4", out4, ref3, 2e-2, 2e-2)

    # Case 5: wide output channels (apply-weight-in-kernel path, C_pad > F_pad).
    N5, F5, C5 = 16, 128, 256
    x5 = jax.random.normal(jax.random.PRNGKey(3), (2, N5, F5),
                           dtype=jnp.float32)
    adj5 = (jax.random.uniform(jax.random.PRNGKey(4), (2, N5, N5)) > 0.5
            ).astype(jnp.float32)
    b5 = math.sqrt(6.0 / (F5 + C5))
    w5 = jax.random.uniform(jax.random.PRNGKey(5), (F5, C5), minval=-b5,
                            maxval=b5, dtype=jnp.float32)
    bias5 = jax.random.normal(jax.random.PRNGKey(6), (C5,), dtype=jnp.float32)
    out5 = jax.block_until_ready(dense_gcn_conv(x5, adj5, w5, bias5))
    assert out5.shape == (2, N5, C5)
    _check("case5", out5, _reference(x5, adj5, w5, bias5), 5e-3, 5e-3)

    print("KERNEL_OK")
</pallas_src>

<mosaic_0001>
module attributes {stable_mosaic.version = 11 : i64} {
  func.func @_gcn_kernel(%arg0: i32, %arg1: i32, %arg2: memref<1x16x128xf32, #tpu.memory_space<vmem>>, %arg3: memref<1x16x16xf32, #tpu.memory_space<vmem>>, %arg4: memref<1x16x1xf32, #tpu.memory_space<vmem>>, %arg5: memref<1x16x1xf32, #tpu.memory_space<vmem>>, %arg6: memref<1x16x128xf32, #tpu.memory_space<vmem>>, %arg7: memref<1x128xf32, #tpu.memory_space<vmem>>, %arg8: memref<1x16x128xf32, #tpu.memory_space<vmem>>) attributes {dimension_semantics = [#tpu.dimension_semantics<parallel>, #tpu.dimension_semantics<parallel>], iteration_bounds = array<i64: 2, 1>, scalar_prefetch = 0 : i64, scratch_operands = 0 : i64, tpu.core_type = #tpu.core_type<tc>, window_params = [{pipeline_mode = #tpu.pipeline_mode<synchronous>, transform_indices = @transform_0, window_bounds = array<i64: 1, 16, 128>}, {transform_indices = @transform_1, window_bounds = array<i64: 1, 16, 16>}, {transform_indices = @transform_2, window_bounds = array<i64: 1, 16, 1>}, {transform_indices = @transform_3, window_bounds = array<i64: 1, 16, 1>}, {transform_indices = @transform_4, window_bounds = array<i64: 1, 16, 128>}, {pipeline_mode = #tpu.pipeline_mode<synchronous>, transform_indices = @transform_5, window_bounds = array<i64: 1, 128>}, {transform_indices = @transform_6, window_bounds = array<i64: 1, 16, 128>}]} {
    %c0 = arith.constant 0 : index
    %c0_0 = arith.constant 0 : index
    %c0_1 = arith.constant 0 : index
    %0 = vector.load %arg3[%c0, %c0_0, %c0_1] : memref<1x16x16xf32, #tpu.memory_space<vmem>>, vector<1x16x16xf32>
    %1 = vector.shape_cast %0 : vector<1x16x16xf32> to vector<16x16xf32>
    %c0_2 = arith.constant 0 : index
    %c0_3 = arith.constant 0 : index
    %c0_4 = arith.constant 0 : index
    %2 = vector.load %arg2[%c0_2, %c0_3, %c0_4] : memref<1x16x128xf32, #tpu.memory_space<vmem>>, vector<1x16x128xf32>
    %3 = vector.shape_cast %2 : vector<1x16x128xf32> to vector<16x128xf32>
    %cst = arith.constant dense<0.000000e+00> : vector<16x128xf32>
    %4 = tpu.matmul %1, %3, %cst {dimension_numbers = #tpu.dot_dimension_numbers<[1], [0], [0], [1], [0, 0, 1, 1], [], []>} : vector<16x16xf32>, vector<16x128xf32>, vector<16x128xf32> -> vector<16x128xf32>
    %c0_5 = arith.constant 0 : index
    %c0_6 = arith.constant 0 : index
    %c0_7 = arith.constant 0 : index
    %5 = vector.load %arg5[%c0_5, %c0_6, %c0_7] : memref<1x16x1xf32, #tpu.memory_space<vmem>>, vector<1x16x1xf32>
    %6 = vector.shape_cast %5 : vector<1x16x1xf32> to vector<16x1xf32>
    %c0_8 = arith.constant 0 : index
    %c0_9 = arith.constant 0 : index
    %c0_10 = arith.constant 0 : index
    %7 = vector.load %arg6[%c0_8, %c0_9, %c0_10] : memref<1x16x128xf32, #tpu.memory_space<vmem>>, vector<1x16x128xf32>
    %8 = vector.shape_cast %7 : vector<1x16x128xf32> to vector<16x128xf32>
    %9 = vector.broadcast %6 : vector<16x1xf32> to vector<16x128xf32>
    %10 = arith.mulf %9, %8 : vector<16x128xf32>
    %11 = arith.addf %4, %10 : vector<16x128xf32>
    %c0_11 = arith.constant 0 : index
    %c0_12 = arith.constant 0 : index
    %c0_13 = arith.constant 0 : index
    %12 = vector.load %arg4[%c0_11, %c0_12, %c0_13] : memref<1x16x1xf32, #tpu.memory_space<vmem>>, vector<1x16x1xf32>
    %13 = vector.shape_cast %12 : vector<1x16x1xf32> to vector<16x1xf32>
    %14 = vector.broadcast %13 : vector<16x1xf32> to vector<16x128xf32>
    %15 = arith.mulf %11, %14 : vector<16x128xf32>
    %c0_14 = arith.constant 0 : index
    %c0_15 = arith.constant 0 : index
    %16 = vector.load %arg7[%c0_14, %c0_15] : memref<1x128xf32, #tpu.memory_space<vmem>>, vector<1x128xf32>
    %17 = vector.broadcast %16 : vector<1x128xf32> to vector<16x128xf32>
    %18 = arith.addf %15, %17 : vector<16x128xf32>
    %c0_16 = arith.constant 0 : index
    %c0_17 = arith.constant 0 : index
    %c0_18 = arith.constant 0 : index
    %19 = vector.load %arg8[%c0_16, %c0_17, %c0_18] : memref<1x16x128xf32, #tpu.memory_space<vmem>>, vector<1x16x128xf32>
    %20 = vector.shape_cast %19 : vector<1x16x128xf32> to vector<16x128xf32>
    %21 = vector.shape_cast %18 : vector<16x128xf32> to vector<1x16x128xf32>
    tpu.vector_store %arg8[%c0_16, %c0_17, %c0_18], %21 {strides = array<i32>} : memref<1x16x128xf32, #tpu.memory_space<vmem>>, vector<1x16x128xf32>,
    return
  }
  func.func @transform_0(%arg0: i32, %arg1: i32) -> (i32, i32, i32) {
    %c0_i32 = arith.constant 0 : i32
    %c0_i32_0 = arith.constant 0 : i32
    %c0_i32_1 = arith.constant 0 : i32
    return %arg0, %c0_i32, %c0_i32_0 : i32, i32, i32
  }
  func.func @transform_1(%arg0: i32, %arg1: i32) -> (i32, i32, i32) {
    %c0_i32 = arith.constant 0 : i32
    %c0_i32_0 = arith.constant 0 : i32
    return %arg0, %arg1, %c0_i32 : i32, i32, i32
  }
  func.func @transform_2(%arg0: i32, %arg1: i32) -> (i32, i32, i32) {
    %c0_i32 = arith.constant 0 : i32
    %c0_i32_0 = arith.constant 0 : i32
    return %arg0, %arg1, %c0_i32 : i32, i32, i32
  }
  func.func @transform_3(%arg0: i32, %arg1: i32) -> (i32, i32, i32) {
    %c0_i32 = arith.constant 0 : i32
    %c0_i32_0 = arith.constant 0 : i32
    return %arg0, %arg1, %c0_i32 : i32, i32, i32
  }
  func.func @transform_4(%arg0: i32, %arg1: i32) -> (i32, i32, i32) {
    %c0_i32 = arith.constant 0 : i32
    %c0_i32_0 = arith.constant 0 : i32
    return %arg0, %arg1, %c0_i32 : i32, i32, i32
  }
  func.func @transform_5(%arg0: i32, %arg1: i32) -> (i32, i32) {
    %c0_i32 = arith.constant 0 : i32
    %c0_i32_0 = arith.constant 0 : i32
    %c0_i32_1 = arith.constant 0 : i32
    return %c0_i32, %c0_i32_0 : i32, i32
  }
  func.func @transform_6(%arg0: i32, %arg1: i32) -> (i32, i32, i32) {
    %c0_i32 = arith.constant 0 : i32
    %c0_i32_0 = arith.constant 0 : i32
    return %arg0, %arg1, %c0_i32 : i32, i32, i32
  }
}

module attributes {stable_mosaic.version = 11 : i64} {
  func.func @_gcn_kernel(%arg0: i32, %arg1: i32, %arg2: memref<1x16x128xf32, #tpu.memory_space<vmem>>, %arg3: memref<1x16x16xf32, #tpu.memory_space<vmem>>, %arg4: memref<1x16x1xf32, #tpu.memory_space<vmem>>, %arg5: memref<1x16x1xf32, #tpu.memory_space<vmem>>, %arg6: memref<1x16x128xf32, #tpu.memory_space<vmem>>, %arg7: memref<1x128xf32, #tpu.memory_space<vmem>>, %arg8: memref<1x16x128xf32, #tpu.memory_space<vmem>>) attributes {dimension_semantics = [#tpu.dimension_semantics<parallel>, #tpu.dimension_semantics<parallel>], iteration_bounds = array<i64: 2, 1>, scalar_prefetch = 0 : i64, scratch_operands = 0 : i64, tpu.core_type = #tpu.core_type<tc>, window_params = [{transform_indices = @transform_0, window_bounds = array<i64: 1, 16, 128>}, {transform_indices = @transform_1, window_bounds = array<i64: 1, 16, 16>}, {transform_indices = @transform_2, window_bounds = array<i64: 1, 16, 1>}, {transform_indices = @transform_3, window_bounds = array<i64: 1, 16, 1>}, {transform_indices = @transform_4, window_bounds = array<i64: 1, 16, 128>}, {pipeline_mode = #tpu.pipeline_mode<synchronous>, transform_indices = @transform_5, window_bounds = array<i64: 1, 128>}, {transform_indices = @transform_6, window_bounds = array<i64: 1, 16, 128>}]} {
    %c0 = arith.constant 0 : index
    %c0_0 = arith.constant 0 : index
    %c0_1 = arith.constant 0 : index
    %0 = vector.load %arg3[%c0, %c0_0, %c0_1] : memref<1x16x16xf32, #tpu.memory_space<vmem>>, vector<1x16x16xf32>
    %1 = vector.shape_cast %0 : vector<1x16x16xf32> to vector<16x16xf32>
    %c0_2 = arith.constant 0 : index
    %c0_3 = arith.constant 0 : index
    %c0_4 = arith.constant 0 : index
    %2 = vector.load %arg2[%c0_2, %c0_3, %c0_4] : memref<1x16x128xf32, #tpu.memory_space<vmem>>, vector<1x16x128xf32>
    %3 = vector.shape_cast %2 : vector<1x16x128xf32> to vector<16x128xf32>
    %cst = arith.constant dense<0.000000e+00> : vector<16x128xf32>
    %4 = tpu.matmul %1, %3, %cst {dimension_numbers = #tpu.dot_dimension_numbers<[1], [0], [0], [1], [0, 0, 1, 1], [], []>} : vector<16x16xf32>, vector<16x128xf32>, vector<16x128xf32> -> vector<16x128xf32>
    %c0_5 = arith.constant 0 : index
    %c0_6 = arith.constant 0 : index
    %c0_7 = arith.constant 0 : index
    %5 = vector.load %arg5[%c0_5, %c0_6, %c0_7] : memref<1x16x1xf32, #tpu.memory_space<vmem>>, vector<1x16x1xf32>
    %6 = vector.shape_cast %5 : vector<1x16x1xf32> to vector<16x1xf32>
    %c0_8 = arith.constant 0 : index
    %c0_9 = arith.constant 0 : index
    %c0_10 = arith.constant 0 : index
    %7 = vector.load %arg6[%c0_8, %c0_9, %c0_10] : memref<1x16x128xf32, #tpu.memory_space<vmem>>, vector<1x16x128xf32>
    %8 = vector.shape_cast %7 : vector<1x16x128xf32> to vector<16x128xf32>
    %9 = vector.broadcast %6 : vector<16x1xf32> to vector<16x128xf32>
    %10 = arith.mulf %9, %8 : vector<16x128xf32>
    %11 = arith.addf %4, %10 : vector<16x128xf32>
    %c0_11 = arith.constant 0 : index
    %c0_12 = arith.constant 0 : index
    %c0_13 = arith.constant 0 : index
    %12 = vector.load %arg4[%c0_11, %c0_12, %c0_13] : memref<1x16x1xf32, #tpu.memory_space<vmem>>, vector<1x16x1xf32>
    %13 = vector.shape_cast %12 : vector<1x16x1xf32> to vector<16x1xf32>
    %14 = vector.broadcast %13 : vector<16x1xf32> to vector<16x128xf32>
    %15 = arith.mulf %11, %14 : vector<16x128xf32>
    %c0_14 = arith.constant 0 : index
    %c0_15 = arith.constant 0 : index
    %16 = vector.load %arg7[%c0_14, %c0_15] : memref<1x128xf32, #tpu.memory_space<vmem>>, vector<1x128xf32>
    %17 = vector.broadcast %16 : vector<1x128xf32> to vector<16x128xf32>
    %18 = arith.addf %15, %17 : vector<16x128xf32>
    %c0_16 = arith.constant 0 : index
    %c0_17 = arith.constant 0 : index
    %c0_18 = arith.constant 0 : index
    %19 = vector.load %arg8[%c0_16, %c0_17, %c0_18] : memref<1x16x128xf32, #tpu.memory_space<vmem>>, vector<1x16x128xf32>
    %20 = vector.shape_cast %19 : vector<1x16x128xf32> to vector<16x128xf32>
    %21 = vector.shape_cast %18 : vector<16x128xf32> to vector<1x16x128xf32>
    tpu.vector_store %arg8[%c0_16, %c0_17, %c0_18], %21 {strides = array<i32>} : memref<1x16x128xf32, #tpu.memory_space<vmem>>, vector<1x16x128xf32>,
    return
  }
  func.func @transform_0(%arg0: i32, %arg1: i32) -> (i32, i32, i32) {
    %c0_i32 = arith.constant 0 : i32
    %c0_i32_0 = arith.constant 0 : i32
    %c0_i32_1 = arith.constant 0 : i32
    return %arg0, %c0_i32, %c0_i32_0 : i32, i32, i32
  }
  func.func @transform_1(%arg0: i32, %arg1: i32) -> (i32, i32, i32) {
    %c0_i32 = arith.constant 0 : i32
    %c0_i32_0 = arith.constant 0 : i32
    return %arg0, %arg1, %c0_i32 : i32, i32, i32
  }
  func.func @transform_2(%arg0: i32, %arg1: i32) -> (i32, i32, i32) {
    %c0_i32 = arith.constant 0 : i32
    %c0_i32_0 = arith.constant 0 : i32
    return %arg0, %arg1, %c0_i32 : i32, i32, i32
  }
  func.func @transform_3(%arg0: i32, %arg1: i32) -> (i32, i32, i32) {
    %c0_i32 = arith.constant 0 : i32
    %c0_i32_0 = arith.constant 0 : i32
    return %arg0, %arg1, %c0_i32 : i32, i32, i32
  }
  func.func @transform_4(%arg0: i32, %arg1: i32) -> (i32, i32, i32) {
    %c0_i32 = arith.constant 0 : i32
    %c0_i32_0 = arith.constant 0 : i32
    return %arg0, %arg1, %c0_i32 : i32, i32, i32
  }
  func.func @transform_5(%arg0: i32, %arg1: i32) -> (i32, i32) {
    %c0_i32 = arith.constant 0 : i32
    %c0_i32_0 = arith.constant 0 : i32
    %c0_i32_1 = arith.constant 0 : i32
    return %c0_i32, %c0_i32_0 : i32, i32
  }
  func.func @transform_6(%arg0: i32, %arg1: i32) -> (i32, i32, i32) {
    %c0_i32 = arith.constant 0 : i32
    %c0_i32_0 = arith.constant 0 : i32
    return %arg0, %arg1, %c0_i32 : i32, i32, i32
  }
}

</mosaic_0001>

<llo_original>
// kernel: tpu_custom_call.1
$region0: #{tpu_custom_call.1}
  #allocation0 [shape = 'u32[]', space=smem, size = 0x4, offset = 0x4, fixed_abs, tag = 'smem constant byte address 0x4 - core index']
  #allocation1 [shape = 'u32[144,128]{1,0:T(1,128)}', space=vmem, size = 0x12000, scoped, tag = 'internal scratch']
  %s0 = inlined_call_operand.vmem [shape: f32[2,16,128], index: 0, kind: input, shape index: {}]
  %s1 = inlined_call_operand.vmem [shape: f32[2,16,16], index: 1, kind: input, shape index: {}]
  %s2 = inlined_call_operand.vmem [shape: f32[2,16,1], index: 2, kind: input, shape index: {}]
  %s3 = inlined_call_operand.vmem [shape: f32[2,16,1], index: 3, kind: input, shape index: {}]
  %s4 = inlined_call_operand.hbm [shape: f32[2,16,128], index: 4, kind: input, shape index: {}]
  %s5 = inlined_call_operand.vmem [shape: f32[1,128], index: 5, kind: input, shape index: {}]
  %s6 = inlined_call_operand.hbm [shape: f32[2,16,128], index: 6, kind: output, shape index: {}]
  %s7 = sld [smem:[#allocation0]]
  $region61: #{tpu_custom_call.1} parent=0
    _
  %s9 = ssub.s32 1, %s7
  %s10 = scalar_select 0, %s9, %s7
  $region1: #{tpu_custom_call.1} parent=0
    #allocation2 [shape = 'u8[16384]{0}', space=vmem, size = 0x4000, scoped, tag = 'input window, operand 4']
    #allocation3 [shape = 's32[2]{0}', space=sflag, size = 0x8, scoped, tag = 'scoped memory for tpu_custom_call.1']
    #allocation4 [shape = 's32[2]{0}', space=sflag, size = 0x8, scoped, tag = 'scoped memory for tpu_custom_call.1']
    #allocation5 [shape = 'u8[16384]{0}', space=vmem, size = 0x4000, scoped, tag = 'output window, operand 0']
    %11 = vsyncpa [#allocation3], 0
    %s12 = scalar_lea.sflag [#allocation3], 1
    %13 = vsyncpa %s12, 0
    %14 = vsyncpa [#allocation4], 0
    %s15 = scalar_lea.sflag [#allocation4], 1
    %16 = vsyncpa %s15, 0
    loop: start=0, step=1, limit=4
    $region2: #{tpu_custom_call.1} parent=1 // loop_pre_header
      _
    $region3: #{tpu_custom_call.1} parent=1 // loop_header
      %s18 = sphi 0, %s22
      %p19 = scmp.ge.s32.totalorder %s18, 4
      %s25 = sphi 0, %s37
      %s26 = sphi 0, %s33
      %s27 = sphi 0, %s25
      %s28 = sphi 0, %s26
      %s29 = sphi 0, %s27
      %s30 = sphi 0, %s28
      %s40 = sphi 0, %s42
      %s43 = sphi 0, %s40
      %s44 = sphi 0, %s43
      %s60 = sphi 0, %s44
      %s68 = sphi 0, %s70
      %s71 = sphi 0, %s68
      %s72 = sphi 0, %s71
      %s88 = sphi 0, %s72
      %s96 = sphi 0, %s98
      %s99 = sphi 0, %s96
      %s100 = sphi 0, %s99
      %s116 = sphi 0, %s100
      %s124 = sphi 0, %s126
      %s127 = sphi 0, %s124
      %s128 = sphi 0, %s127
      %s144 = sphi 0, %s128
      %s152 = sphi 0, %s154
      %s155 = sphi 0, %s152
      %s156 = sphi 0, %s155
      %s172 = sphi 0, %s156
      %s176 = sphi 0, %s176
      %s178 = sphi 0, %s176
      %s179 = sphi 0, %s178
      %s193 = sphi 0, %s179
      %s201 = sphi 0, %s203
      %s204 = sphi 0, %s201
      %s205 = sphi 0, %s204
      %s221 = sphi 0, %s205
    $region4: #{tpu_custom_call.1} parent=1 // loop_header_branch
      %21 = sbr.rel (%p19) target = $region8
    $region5: #{tpu_custom_call.1} parent=1 // loop_body
      %s23 = ssub.s32 %s18, 1
      %s24 = ssub.s32 %s18, 2
      %s31 = sadd.s32 1, %s26
      %p32 = scmp.ge.s32.totalorder %s31, 1
      %s33 = scalar_select %p32, 0, %s31
      %s34 = sadd.s32 1, %s25
      %s35 = scalar_select %p32, %s34, %s25
      %p36 = scmp.ge.s32.totalorder %s35, 2
      %s37 = scalar_select %p36, 0, %s35
      %s38 = ssub.s32 %s25, %s37
      %p39 = scmp.eq.s32.totalorder %s38, 0
      %s41 = sadd.s32 %s40, 1
      %s42 = scalar_select %p39, %s40, %s41
      %p45 = pneg %p39
      %p46 = scmp.eq.s32.totalorder %s18, 1
      %p47 = por %p45, %p46
      %p48 = scmp.ne.s32.totalorder %s40, %s43
      %p49 = scmp.eq.s32.totalorder %s18, 0
      %p50 = por %p48, %p49
      %p51 = scmp.ne.s32.totalorder %s40, %s43
      %p52 = scmp.eq.s32.totalorder %s23, 1
      %p53 = por %p51, %p52
      %p54 = scmp.ne.s32.totalorder %s43, %s44
      %p55 = scmp.eq.s32.totalorder %s23, 0
      %p56 = por %p54, %p55
      %p57 = scmp.ne.s32.totalorder %s43, %s44
      %p58 = scmp.eq.s32.totalorder %s24, 1
      %p59 = por %p57, %p58
      %p61 = scmp.ne.s32.totalorder %s44, %s60
      %p62 = scmp.eq.s32.totalorder %s24, 0
      %p63 = por %p61, %p62
      %s64 = ssub.s32 %s25, %s37
      %s65 = ssub.s32 %s26, %s33
      %s66 = sor.u32 %s64, %s65
      %p67 = scmp.eq.s32.totalorder %s66, 0
      %s69 = sadd.s32 %s68, 1
      %s70 = scalar_select %p67, %s68, %s69
      %p73 = pneg %p67
      %p74 = scmp.eq.s32.totalorder %s18, 1
      %p75 = por %p73, %p74
      %p76 = scmp.ne.s32.totalorder %s68, %s71
      %p77 = scmp.eq.s32.totalorder %s18, 0
      %p78 = por %p76, %p77
      %p79 = scmp.ne.s32.totalorder %s68, %s71
      %p80 = scmp.eq.s32.totalorder %s23, 1
      %p81 = por %p79, %p80
      %p82 = scmp.ne.s32.totalorder %s71, %s72
      %p83 = scmp.eq.s32.totalorder %s23, 0
      %p84 = por %p82, %p83
      %p85 = scmp.ne.s32.totalorder %s71, %s72
      %p86 = scmp.eq.s32.totalorder %s24, 1
      %p87 = por %p85, %p86
      %p89 = scmp.ne.s32.totalorder %s72, %s88
      %p90 = scmp.eq.s32.totalorder %s24, 0
      %p91 = por %p89, %p90
      %s92 = ssub.s32 %s25, %s37
      %s93 = ssub.s32 %s26, %s33
      %s94 = sor.u32 %s92, %s93
      %p95 = scmp.eq.s32.totalorder %s94, 0
      %s97 = sadd.s32 %s96, 1
      %s98 = scalar_select %p95, %s96, %s97
      %p101 = pneg %p95
      %p102 = scmp.eq.s32.totalorder %s18, 1
      %p103 = por %p101, %p102
      %p104 = scmp.ne.s32.totalorder %s96, %s99
      %p105 = scmp.eq.s32.totalorder %s18, 0
      %p106 = por %p104, %p105
      %p107 = scmp.ne.s32.totalorder %s96, %s99
      %p108 = scmp.eq.s32.totalorder %s23, 1
      %p109 = por %p107, %p108
      %p110 = scmp.ne.s32.totalorder %s99, %s100
      %p111 = scmp.eq.s32.totalorder %s23, 0
      %p112 = por %p110, %p111
      %p113 = scmp.ne.s32.totalorder %s99, %s100
      %p114 = scmp.eq.s32.totalorder %s24, 1
      %p115 = por %p113, %p114
      %p117 = scmp.ne.s32.totalorder %s100, %s116
      %p118 = scmp.eq.s32.totalorder %s24, 0
      %p119 = por %p117, %p118
      %s120 = ssub.s32 %s25, %s37
      %s121 = ssub.s32 %s26, %s33
      %s122 = sor.u32 %s120, %s121
      %p123 = scmp.eq.s32.totalorder %s122, 0
      %s125 = sadd.s32 %s124, 1
      %s126 = scalar_select %p123, %s124, %s125
      %p129 = pneg %p123
      %p130 = scmp.eq.s32.totalorder %s18, 1
      %p131 = por %p129, %p130
      %p132 = scmp.ne.s32.totalorder %s124, %s127
      %p133 = scmp.eq.s32.totalorder %s18, 0
      %p134 = por %p132, %p133
      %p135 = scmp.ne.s32.totalorder %s124, %s127
      %p136 = scmp.eq.s32.totalorder %s23, 1
      %p137 = por %p135, %p136
      %p138 = scmp.ne.s32.totalorder %s127, %s128
      %p139 = scmp.eq.s32.totalorder %s23, 0
      %p140 = por %p138, %p139
      %p141 = scmp.ne.s32.totalorder %s127, %s128
      %p142 = scmp.eq.s32.totalorder %s24, 1
      %p143 = por %p141, %p142
      %p145 = scmp.ne.s32.totalorder %s128, %s144
      %p146 = scmp.eq.s32.totalorder %s24, 0
      %p147 = por %p145, %p146
      %s148 = ssub.s32 %s25, %s37
      %s149 = ssub.s32 %s26, %s33
      %s150 = sor.u32 %s148, %s149
      %p151 = scmp.eq.s32.totalorder %s150, 0
      %s153 = sadd.s32 %s152, 1
      %s154 = scalar_select %p151, %s152, %s153
      %p157 = pneg %p151
      %p158 = scmp.eq.s32.totalorder %s18, 1
      %p159 = por %p157, %p158
      %p160 = scmp.ne.s32.totalorder %s152, %s155
      %p161 = scmp.eq.s32.totalorder %s18, 0
      %p162 = por %p160, %p161
      %p163 = scmp.ne.s32.totalorder %s152, %s155
      %p164 = scmp.eq.s32.totalorder %s23, 1
      %p165 = por %p163, %p164
      %p166 = scmp.ne.s32.totalorder %s155, %s156
      %p167 = scmp.eq.s32.totalorder %s23, 0
      %p168 = por %p166, %p167
      %p169 = scmp.ne.s32.totalorder %s155, %s156
      %p170 = scmp.eq.s32.totalorder %s24, 1
      %p171 = por %p169, %p170
      %p173 = scmp.ne.s32.totalorder %s156, %s172
      %p174 = scmp.eq.s32.totalorder %s24, 0
      %p175 = por %p173, %p174
      %s177 = sadd.s32 %s176, 1
      %p180 = scmp.eq.s32.totalorder %s18, 1
      %p181 = scmp.ne.s32.totalorder %s176, %s178
      %p182 = scmp.eq.s32.totalorder %s18, 0
      %p183 = por %p181, %p182
      %p184 = scmp.ne.s32.totalorder %s176, %s178
      %p185 = scmp.eq.s32.totalorder %s23, 1
      %p186 = por %p184, %p185
      %p187 = scmp.ne.s32.totalorder %s178, %s179
      %p188 = scmp.eq.s32.totalorder %s23, 0
      %p189 = por %p187, %p188
      %p190 = scmp.ne.s32.totalorder %s178, %s179
      %p191 = scmp.eq.s32.totalorder %s24, 1
      %p192 = por %p190, %p191
      %p194 = scmp.ne.s32.totalorder %s179, %s193
      %p195 = scmp.eq.s32.totalorder %s24, 0
      %p196 = por %p194, %p195
      %s197 = ssub.s32 %s25, %s37
      %s198 = ssub.s32 %s26, %s33
      %s199 = sor.u32 %s197, %s198
      %p200 = scmp.eq.s32.totalorder %s199, 0
      %s202 = sadd.s32 %s201, 1
      %s203 = scalar_select %p200, %s201, %s202
      %p206 = pneg %p200
      %p207 = scmp.eq.s32.totalorder %s18, 1
      %p208 = por %p206, %p207
      %p209 = scmp.ne.s32.totalorder %s201, %s204
      %p210 = scmp.eq.s32.totalorder %s18, 0
      %p211 = por %p209, %p210
      %p212 = scmp.ne.s32.totalorder %s201, %s204
      %p213 = scmp.eq.s32.totalorder %s23, 1
      %p214 = por %p212, %p213
      %p215 = scmp.ne.s32.totalorder %s204, %s205
      %p216 = scmp.eq.s32.totalorder %s23, 0
      %p217 = por %p215, %p216
      %p218 = scmp.ne.s32.totalorder %s204, %s205
      %p219 = scmp.eq.s32.totalorder %s24, 1
      %p220 = por %p218, %p219
      %p222 = scmp.ne.s32.totalorder %s205, %s221
      %p223 = scmp.eq.s32.totalorder %s24, 0
      %p224 = por %p222, %p223
      %p225 = scmp.le.s32.totalorder 1, %s18
      %p226 = scmp.lt.s32.totalorder %s18, 3
      %p227 = pnand %p225, %p226
      %p228 = pneg %p227
      // Predicated region
      $region9: #{tpu_custom_call.1} parent=5 // pred_check
        _
      $region10: #{tpu_custom_call.1} parent=5 // pred_check_branch
        %230 = sbr.rel (%p227) target = $region12
      $region11: #{tpu_custom_call.1} parent=5 // pred_region
        %s231 = ssub.s32 %s18, 1
        // Predicated region
        $region13: #{tpu_custom_call.1} parent=11 // pred_check
          %p232 = pneg %p56
        $region14: #{tpu_custom_call.1} parent=11 // pred_check_branch
          %234 = sbr.rel (%p232) target = $region16
        $region15: #{tpu_custom_call.1} parent=11 // pred_region
          %p235 = scmp.lt.s32.totalorder %s27, 1
          %s236 = scalar_select %p235, %s27, 1
          %s237 = smul.addr %s236, 2
          %s238 = smul.addr %s237, 8
          %s239 = scalar_lea.vmem %s0, %s238
        $region16: #{tpu_custom_call.1} parent=11 // pred_fallthru
          _
        // Predicated region
        $region17: #{tpu_custom_call.1} parent=11 // pred_check
          %p240 = pneg %p189
        $region18: #{tpu_custom_call.1} parent=11 // pred_check_branch
          %242 = sbr.rel (%p240) target = $region20
        $region19: #{tpu_custom_call.1} parent=11 // pred_region
          _
        $region20: #{tpu_custom_call.1} parent=11 // pred_fallthru
          _
      $region12: #{tpu_custom_call.1} parent=5 // pred_fallthru
        _
      %p243 = scmp.lt.s32.totalorder %s18, 2
      // Predicated region
      $region21: #{tpu_custom_call.1} parent=5 // pred_check
        %p244 = pneg %p243
      $region22: #{tpu_custom_call.1} parent=5 // pred_check_branch
        %246 = sbr.rel (%p244) target = $region24
      $region23: #{tpu_custom_call.1} parent=5 // pred_region
        // Predicated region
        $region25: #{tpu_custom_call.1} parent=23 // pred_check
          %p247 = pneg %p78
        $region26: #{tpu_custom_call.1} parent=23 // pred_check_branch
          %249 = sbr.rel (%p247) target = $region28
        $region27: #{tpu_custom_call.1} parent=23 // pred_region
          %s250 = smul.u32 2, %s26
          %p251 = scmp.lt.s32.totalorder %s25, 1
          %s252 = scalar_select %p251, %s25, 1
          %p253 = scmp.lt.s32.totalorder %s250, 1
          %s254 = scalar_select %p253, %s250, 1
          %s255 = smul.addr %s252, 2
          %s256 = sadd.s32 %s254, %s255
          %s257 = smul.addr %s256, 8
          %s258 = scalar_lea.vmem %s1, %s257
          %s259 = smul.u32 2, %s26
        $region28: #{tpu_custom_call.1} parent=23 // pred_fallthru
          _
        // Predicated region
        $region29: #{tpu_custom_call.1} parent=23 // pred_check
          %p260 = pneg %p106
        $region30: #{tpu_custom_call.1} parent=23 // pred_check_branch
          %262 = sbr.rel (%p260) target = $region32
        $region31: #{tpu_custom_call.1} parent=23 // pred_region
          %s263 = smul.u32 2, %s26
          %p264 = scmp.lt.s32.totalorder %s25, 1
          %s265 = scalar_select %p264, %s25, 1
          %p266 = scmp.lt.s32.totalorder %s263, 1
          %s267 = scalar_select %p266, %s263, 1
          %s268 = smul.addr %s265, 2
          %s269 = sadd.s32 %s267, %s268
          %s270 = smul.addr %s269, 8
          %s271 = scalar_lea.vmem %s2, %s270
          %s272 = smul.u32 2, %s26
        $region32: #{tpu_custom_call.1} parent=23 // pred_fallthru
          _
        // Predicated region
        $region33: #{tpu_custom_call.1} parent=23 // pred_check
          %p273 = pneg %p134
        $region34: #{tpu_custom_call.1} parent=23 // pred_check_branch
          %275 = sbr.rel (%p273) target = $region36
        $region35: #{tpu_custom_call.1} parent=23 // pred_region
          %s276 = smul.u32 2, %s26
          %p277 = scmp.lt.s32.totalorder %s25, 1
          %s278 = scalar_select %p277, %s25, 1
          %p279 = scmp.lt.s32.totalorder %s276, 1
          %s280 = scalar_select %p279, %s276, 1
          %s281 = smul.addr %s278, 2
          %s282 = sadd.s32 %s280, %s281
          %s283 = smul.addr %s282, 8
          %s284 = scalar_lea.vmem %s3, %s283
          %s285 = smul.u32 2, %s26
        $region36: #{tpu_custom_call.1} parent=23 // pred_fallthru
          _
        // Predicated region
        $region37: #{tpu_custom_call.1} parent=23 // pred_check
          %p286 = pneg %p162
        $region38: #{tpu_custom_call.1} parent=23 // pred_check_branch
          %288 = sbr.rel (%p286) target = $region40
        $region39: #{tpu_custom_call.1} parent=23 // pred_region
          %s289 = sand.u32 %s152, 1
          %s290 = scalar_lea.sflag [#allocation3], %s289
          %s291 = sand.u32 %s152, 1
          %s292 = smul.addr %s291, 16
          %s293 = scalar_lea.vmem [#allocation2], %s292
          %s294 = smul.u32 2, %s26
          %s296 = ssub.s32 256, 256
          %297 = vsyncadd %s290, %s296
          %s298 = smul.addr %s25, 2
          %s299 = sadd.s32 %s294, %s298
          %s300 = smul.addr %s299, 128
          %s301 = scalar_lea.hbm %s4, %s300
          %s302 = sshll.u32 %s293, 4
          %s303 = int_to_ptr.vmem [resolvable:$true] %s302
          %308 = dma.hbm_to_vmem [thread:$0]  %s301, 256, %s303, %s290, 128, 128, 8
        $region40: #{tpu_custom_call.1} parent=23 // pred_fallthru
          _
      $region24: #{tpu_custom_call.1} parent=5 // pred_fallthru
        _
      %p309 = scmp.le.s32.totalorder 1, %s18
      %p310 = scmp.lt.s32.totalorder %s18, 3
      %p311 = pnand %p309, %p310
      %p312 = pneg %p311
      // Predicated region
      $region41: #{tpu_custom_call.1} parent=5 // pred_check
        _
      $region42: #{tpu_custom_call.1} parent=5 // pred_check_branch
        %314 = sbr.rel (%p311) target = $region44
      $region43: #{tpu_custom_call.1} parent=5 // pred_region
        %s315 = ssub.s32 %s18, 1
        %s316 = sand.u32 %s155, 1
        %s317 = scalar_lea.sflag [#allocation3], %s316
        %s318 = sand.u32 %s155, 1
        %s319 = smul.addr %s318, 16
        %s320 = scalar_lea.vmem [#allocation2], %s319
        // Predicated region
        $region45: #{tpu_custom_call.1} parent=43 // pred_check
          %p321 = pneg %p168
        $region46: #{tpu_custom_call.1} parent=43 // pred_check_branch
          %323 = sbr.rel (%p321) target = $region48
        $region47: #{tpu_custom_call.1} parent=43 // pred_region
          %324 = dma.done %s317, 256
        $region48: #{tpu_custom_call.1} parent=43 // pred_fallthru
          _
        %p325 = scmp.lt.s32.totalorder %s27, 1
        %s326 = scalar_select %p325, %s27, 1
        %s327 = smul.addr %s326, 2
        %s328 = smul.addr %s327, 8
        %s329 = scalar_lea.vmem %s0, %s328
        %p330 = pneg %p56
        %p331 = pneg %p53
        %s332 = smul.u32 2, %s28
        %p333 = scmp.lt.s32.totalorder %s27, 1
        %s334 = scalar_select %p333, %s27, 1
        %p335 = scmp.lt.s32.totalorder %s332, 1
        %s336 = scalar_select %p335, %s332, 1
        %s337 = smul.addr %s334, 2
        %s338 = sadd.s32 %s336, %s337
        %s339 = smul.addr %s338, 8
        %s340 = scalar_lea.vmem %s1, %s339
        %p341 = pneg %p84
        %p342 = pneg %p81
        %s343 = smul.u32 2, %s28
        %p344 = scmp.lt.s32.totalorder %s27, 1
        %s345 = scalar_select %p344, %s27, 1
        %p346 = scmp.lt.s32.totalorder %s343, 1
        %s347 = scalar_select %p346, %s343, 1
        %s348 = smul.addr %s345, 2
        %s349 = sadd.s32 %s347, %s348
        %s350 = smul.addr %s349, 8
        %s351 = scalar_lea.vmem %s2, %s350
        %p352 = pneg %p112
        %p353 = pneg %p109
        %s354 = smul.u32 2, %s28
        %p355 = scmp.lt.s32.totalorder %s27, 1
        %s356 = scalar_select %p355, %s27, 1
        %p357 = scmp.lt.s32.totalorder %s354, 1
        %s358 = scalar_select %p357, %s354, 1
        %s359 = smul.addr %s356, 2
        %s360 = sadd.s32 %s358, %s359
        %s361 = smul.addr %s360, 8
        %s362 = scalar_lea.vmem %s3, %s361
        %p363 = pneg %p140
        %p364 = pneg %p137
        %s365 = sand.u32 %s155, 1
        %s366 = scalar_lea.sflag [#allocation3], %s365
        %s367 = sand.u32 %s155, 1
        %s368 = smul.addr %s367, 16
        %s369 = scalar_lea.vmem [#allocation2], %s368
        %p370 = pneg %p168
        %p371 = pneg %p165
        %p372 = pneg %p189
        %p373 = pneg %p186
        %p374 = pneg %p217
        %p375 = pneg %p214
        %s376 = sand.u32 %s204, 1
        %s377 = scalar_lea.sflag [#allocation4], %s376
        %s378 = sand.u32 %s204, 1
        %s379 = smul.addr %s378, 16
        %s380 = scalar_lea.vmem [#allocation5], %s379
        %p381 = scmp.lt.s32.totalorder %s27, 1
        %s382 = scalar_select %p381, %s27, 1
        %s383 = smul.addr %s382, 2
        %s384 = smul.addr %s383, 8
        %s385 = scalar_lea.vmem %s0, %s384
        %s386 = smul.u32 2, %s28
        %p387 = scmp.lt.s32.totalorder %s27, 1
        %s388 = scalar_select %p387, %s27, 1
        %p389 = scmp.lt.s32.totalorder %s386, 1
        %s390 = scalar_select %p389, %s386, 1
        %s391 = smul.addr %s388, 2
        %s392 = sadd.s32 %s390, %s391
        %s393 = smul.addr %s392, 8
        %s394 = scalar_lea.vmem %s1, %s393
        %s395 = smul.u32 2, %s28
        %s396 = smul.u32 2, %s28
        %p397 = scmp.lt.s32.totalorder %s27, 1
        %s398 = scalar_select %p397, %s27, 1
        %p399 = scmp.lt.s32.totalorder %s396, 1
        %s400 = scalar_select %p399, %s396, 1
        %s401 = smul.addr %s398, 2
        %s402 = sadd.s32 %s400, %s401
        %s403 = smul.addr %s402, 8
        %s404 = scalar_lea.vmem %s2, %s403
        %s405 = smul.u32 2, %s28
        %s406 = smul.u32 2, %s28
        %p407 = scmp.lt.s32.totalorder %s27, 1
        %s408 = scalar_select %p407, %s27, 1
        %p409 = scmp.lt.s32.totalorder %s406, 1
        %s410 = scalar_select %p409, %s406, 1
        %s411 = smul.addr %s408, 2
        %s412 = sadd.s32 %s410, %s411
        %s413 = smul.addr %s412, 8
        %s414 = scalar_lea.vmem %s3, %s413
        %s415 = smul.u32 2, %s28
        %s416 = smul.u32 2, %s28
        %s417 = smul.u32 2, %s28
        %v418 = vld [vmem:[%s394] sm:$0xff]
        %v419 = vld [vmem:[%s394 + $0x8] sm:$0xff]
        %v420 = vld [vmem:[%s385] sm:$0xff]
        %v421 = vld [vmem:[%s385 + $0x8] sm:$0xff]
        %v422 = vld [vmem:[%s414] sm:$0xff]
        %v423 = vld [vmem:[%s414 + $0x8] sm:$0xff]
        %v424 = vld [vmem:[%s320] sm:$0xff]
        %v425 = vld [vmem:[%s320 + $0x8] sm:$0xff]
        %427 = vset.pattern.permute.xlu0 0
        %428 = vperm.xlu0 %427, %v422
        %v429 = vpop.permute.xlu0 %428
        %432 = vset.pattern.permute.xlu0 0
        %433 = vperm.xlu0 %432, %v423
        %v434 = vpop.permute.xlu0 %433
        %v436 = vmul.f32 %v429, %v424
        %v437 = vmul.f32 %v434, %v425
        %vm438 = vcmask 130048
        %v440 = vsel %vm438, %v418, 0
        %v443 = vsel %vm438, %v419, 0
        %445 = vmatprep.subr.mxu0 0.0
        %446 = vmatpush1.msra.mxu0 0.0
        %447 = vmatprep.subr.mxu0 0.0
        %448 = vmatpush1.msra.mxu0 0.0
        %449 = vmatprep.subr.mxu0 0.0
        %450 = vmatpush1.msra.mxu0 0.0
        %451 = vmatprep.subr.mxu0 0.0
        %452 = vmatpush1.msra.mxu0 0.0
        %453 = vmatprep.subr.mxu0 0.0
        %454 = vmatpush1.msra.mxu0 0.0
        %455 = vmatprep.subr.mxu0 0.0
        %456 = vmatpush1.msra.mxu0 0.0
        %457 = vmatprep.subr.mxu0 0.0
        %458 = vmatpush1.msra.mxu0 0.0
        %459 = vmatprep.subr.mxu0 0.0
        %460 = vmatpush1.msra.mxu0 0.0
        %461 = vmatprep.subr.mxu0 0.0
        %462 = vmatpush1.msra.mxu0 0.0
        %463 = vmatprep.subr.mxu0 0.0
        %464 = vmatpush1.msra.mxu0 0.0
        %465 = vmatprep.subr.mxu0 0.0
        %466 = vmatpush1.msra.mxu0 0.0
        %467 = vmatprep.subr.mxu0 0.0
        %468 = vmatpush1.msra.mxu0 0.0
        %469 = vmatprep.subr.mxu0 0.0
        %470 = vmatpush1.msra.mxu0 0.0
        %471 = vmatprep.subr.mxu0 0.0
        %472 = vmatpush1.msra.mxu0 0.0
        %473 = vmatprep.subr.mxu0 0.0
        %474 = vmatpush1.msra.mxu0 %v421
        %475 = vmatprep.subr.mxu0 0.0
        %476 = vmatpush1.msra.mxu0 %v420
        %477 = vmatprep.subr.mxu0 0.0
        %478 = vmatpush2.msra.mxu0 0.0
        %479 = vmatprep.subr.mxu0 0.0
        %480 = vmatpush2.msra.mxu0 0.0
        %481 = vmatprep.subr.mxu0 0.0
        %482 = vmatpush2.msra.mxu0 0.0
        %483 = vmatprep.subr.mxu0 0.0
        %484 = vmatpush2.msra.mxu0 0.0
        %485 = vmatprep.subr.mxu0 0.0
        %486 = vmatpush2.msra.mxu0 0.0
        %487 = vmatprep.subr.mxu0 0.0
        %488 = vmatpush2.msra.mxu0 0.0
        %489 = vmatprep.subr.mxu0 0.0
        %490 = vmatpush2.msra.mxu0 0.0
        %491 = vmatprep.subr.mxu0 0.0
        %492 = vmatpush2.msra.mxu0 0.0
        %493 = vmatprep.subr.mxu0 0.0
        %494 = vmatpush2.msra.mxu0 0.0
        %495 = vmatprep.subr.mxu0 0.0
        %496 = vmatpush2.msra.mxu0 0.0
        %497 = vmatprep.subr.mxu0 0.0
        %498 = vmatpush2.msra.mxu0 0.0
        %499 = vmatprep.subr.mxu0 0.0
        %500 = vmatpush2.msra.mxu0 0.0
        %501 = vmatprep.subr.mxu0 0.0
        %502 = vmatpush2.msra.mxu0 0.0
        %503 = vmatprep.subr.mxu0 0.0
        %504 = vmatpush2.msra.mxu0 0.0
        %505 = vmatprep.subr.mxu0 0.0
        %506 = vmatpush2.msra.mxu0 0.0
        %507 = vmatprep.subr.mxu0 0.0
        %508 = vmatpush2.msra.mxu0 0.0
        %509 = vmatprep.mubr.f32.mxu0 0.0
        %510 = vmatmul.mubr.f32.gmra.mxu0 %v440
        %v511 = vpop.f32.mrf.mxu0
        %v512 = vadd.f32 %v436, %v511
        %v513 = vpop.f32.mrf.mxu0
        %514 = vmatprep.mubr.f32.mxu0 0.0
        %515 = vmatmul.mubr.f32.gmra.mxu0 %v443
        %v516 = vpop.f32.mrf.mxu0
        %v517 = vadd.f32 %v437, %v516
        %v518 = vpop.f32.mrf.mxu0
        %519 = vdwg.mxu0
        %v520 = vld [vmem:[%s404] sm:$0xff]
        %v521 = vld [vmem:[%s404 + $0x8] sm:$0xff]
        %523 = vset.pattern.permute.xlu0 0
        %524 = vperm.xlu0 %523, %v520
        %v525 = vpop.permute.xlu0 %524
        %528 = vset.pattern.permute.xlu0 0
        %529 = vperm.xlu0 %528, %v521
        %v530 = vpop.permute.xlu0 %529
        %v532 = vmul.f32 %v512, %v525
        %v533 = vmul.f32 %v517, %v530
        %v534 = vld [vmem:[%s5] sm:$0x1]
        %v536 = vlaneseq
        %v537 = vshrl.u32 %v536, 7
        %v538 = vsub.s32 0, %v537
        %v539 = vrot.slane %v534, %v538
        %v541 = vadd.f32 %v532, %v539
        %v542 = vadd.f32 %v533, %v539
        %543 = vst [vmem:[%s380] sm:$0xff] %v541
        %544 = vst [vmem:[%s380 + $0x8] sm:$0xff] %v542
        %s545 = sand.u32 %s204, 1
        %s546 = scalar_lea.sflag [#allocation4], %s545
        %s547 = sand.u32 %s204, 1
        %s548 = smul.addr %s547, 16
        %s549 = scalar_lea.vmem [#allocation5], %s548
        // Predicated region
        $region49: #{tpu_custom_call.1} parent=43 // pred_check
          %p550 = pneg %p214
        $region50: #{tpu_custom_call.1} parent=43 // pred_check_branch
          %552 = sbr.rel (%p550) target = $region52
        $region51: #{tpu_custom_call.1} parent=43 // pred_region
          %s553 = smul.u32 2, %s28
          %s555 = ssub.s32 256, 256
          %556 = vsyncadd %s546, %s555
          %s557 = smul.addr %s27, 2
          %s558 = sadd.s32 %s553, %s557
          %s559 = smul.addr %s558, 128
          %s560 = scalar_lea.hbm %s6, %s559
          %s561 = sshll.u32 %s549, 4
          %s562 = int_to_ptr.vmem [resolvable:$true] %s561
          %567 = dma.vmem_to_hbm [thread:$0]  %s562, 256, %s560, %s546, 128, 128, 8
        $region52: #{tpu_custom_call.1} parent=43 // pred_fallthru
          _
      $region44: #{tpu_custom_call.1} parent=5 // pred_fallthru
        _
      %p568 = scmp.le.s32.totalorder 2, %s18
      // Predicated region
      $region53: #{tpu_custom_call.1} parent=5 // pred_check
        %p569 = pneg %p568
      $region54: #{tpu_custom_call.1} parent=5 // pred_check_branch
        %571 = sbr.rel (%p569) target = $region56
      $region55: #{tpu_custom_call.1} parent=5 // pred_region
        %s572 = ssub.s32 %s18, 2
        // Predicated region
        $region57: #{tpu_custom_call.1} parent=55 // pred_check
          %p573 = pneg %p220
        $region58: #{tpu_custom_call.1} parent=55 // pred_check_branch
          %575 = sbr.rel (%p573) target = $region60
        $region59: #{tpu_custom_call.1} parent=55 // pred_region
          %s576 = sand.u32 %s205, 1
          %s577 = scalar_lea.sflag [#allocation4], %s576
          %s578 = sand.u32 %s205, 1
          %s579 = smul.addr %s578, 16
          %s580 = scalar_lea.vmem [#allocation5], %s579
          %581 = dma.done %s577, 256
        $region60: #{tpu_custom_call.1} parent=55 // pred_fallthru
          _
      $region56: #{tpu_custom_call.1} parent=5 // pred_fallthru
        _
    $region6: #{tpu_custom_call.1} parent=1 // loop_footer
      %s22 = sadd.s32 1, %s18
    $region7: #{tpu_custom_call.1} parent=1 // loop_footer_branch
      %17 = sbr.rel target = $region3
    $region8: #{tpu_custom_call.1} parent=1 // loop_exit
      _
    %582 = vsyncpa [#allocation3], 1
    %s583 = scalar_lea.sflag [#allocation3], 1
    %584 = vsyncpa %s583, 1
    %585 = vsyncpa [#allocation4], 1
    %s586 = scalar_lea.sflag [#allocation4], 1
    %587 = vsyncpa %s586, 1

// kernel: tpu_custom_call.1
$region0: #{tpu_custom_call.1}
  #allocation0 [shape = 'u32[]', space=smem, size = 0x4, offset = 0x4, fixed_abs, tag = 'smem constant byte address 0x4 - core index']
  #allocation1 [shape = 'u32[144,128]{1,0:T(1,128)}', space=vmem, size = 0x12000, scoped, tag = 'internal scratch']
  %s0 = inlined_call_operand.vmem [shape: f32[2,16,128], index: 0, kind: input, shape index: {}]
  %s1 = inlined_call_operand.vmem [shape: f32[2,16,16], index: 1, kind: input, shape index: {}]
  %s2 = inlined_call_operand.vmem [shape: f32[2,16,1], index: 2, kind: input, shape index: {}]
  %s3 = inlined_call_operand.vmem [shape: f32[2,16,1], index: 3, kind: input, shape index: {}]
  %s4 = inlined_call_operand.hbm [shape: f32[2,16,128], index: 4, kind: input, shape index: {}]
  %s5 = inlined_call_operand.vmem [shape: f32[1,128], index: 5, kind: input, shape index: {}]
  %s6 = inlined_call_operand.hbm [shape: f32[2,16,128], index: 6, kind: output, shape index: {}]
  %s7 = sld [smem:[#allocation0]]
  $region61: #{tpu_custom_call.1} parent=0
    _
  %s9 = ssub.s32 1, %s7
  %s10 = scalar_select 0, %s9, %s7
  $region1: #{tpu_custom_call.1} parent=0
    #allocation2 [shape = 'u8[16384]{0}', space=vmem, size = 0x4000, scoped, tag = 'input window, operand 4']
    #allocation3 [shape = 's32[2]{0}', space=sflag, size = 0x8, scoped, tag = 'scoped memory for tpu_custom_call.1']
    #allocation4 [shape = 's32[2]{0}', space=sflag, size = 0x8, scoped, tag = 'scoped memory for tpu_custom_call.1']
    #allocation5 [shape = 'u8[16384]{0}', space=vmem, size = 0x4000, scoped, tag = 'output window, operand 0']
    %11 = vsyncpa [#allocation3], 0
    %s12 = scalar_lea.sflag [#allocation3], 1
    %13 = vsyncpa %s12, 0
    %14 = vsyncpa [#allocation4], 0
    %s15 = scalar_lea.sflag [#allocation4], 1
    %16 = vsyncpa %s15, 0
    loop: start=0, step=1, limit=4
    $region2: #{tpu_custom_call.1} parent=1 // loop_pre_header
      _
    $region3: #{tpu_custom_call.1} parent=1 // loop_header
      %s18 = sphi 0, %s22
      %p19 = scmp.ge.s32.totalorder %s18, 4
      %s25 = sphi 0, %s37
      %s26 = sphi 0, %s33
      %s27 = sphi 0, %s25
      %s28 = sphi 0, %s26
      %s29 = sphi 0, %s27
      %s30 = sphi 0, %s28
      %s40 = sphi 0, %s42
      %s43 = sphi 0, %s40
      %s44 = sphi 0, %s43
      %s60 = sphi 0, %s44
      %s68 = sphi 0, %s70
      %s71 = sphi 0, %s68
      %s72 = sphi 0, %s71
      %s88 = sphi 0, %s72
      %s96 = sphi 0, %s98
      %s99 = sphi 0, %s96
      %s100 = sphi 0, %s99
      %s116 = sphi 0, %s100
      %s124 = sphi 0, %s126
      %s127 = sphi 0, %s124
      %s128 = sphi 0, %s127
      %s144 = sphi 0, %s128
      %s152 = sphi 0, %s154
      %s155 = sphi 0, %s152
      %s156 = sphi 0, %s155
      %s172 = sphi 0, %s156
      %s176 = sphi 0, %s176
      %s178 = sphi 0, %s176
      %s179 = sphi 0, %s178
      %s193 = sphi 0, %s179
      %s201 = sphi 0, %s203
      %s204 = sphi 0, %s201
      %s205 = sphi 0, %s204
      %s221 = sphi 0, %s205
    $region4: #{tpu_custom_call.1} parent=1 // loop_header_branch
      %21 = sbr.rel (%p19) target = $region8
    $region5: #{tpu_custom_call.1} parent=1 // loop_body
      %s23 = ssub.s32 %s18, 1
      %s24 = ssub.s32 %s18, 2
      %s31 = sadd.s32 1, %s26
      %p32 = scmp.ge.s32.totalorder %s31, 1
      %s33 = scalar_select %p32, 0, %s31
      %s34 = sadd.s32 1, %s25
      %s35 = scalar_select %p32, %s34, %s25
      %p36 = scmp.ge.s32.totalorder %s35, 2
      %s37 = scalar_select %p36, 0, %s35
      %s38 = ssub.s32 %s25, %s37
      %p39 = scmp.eq.s32.totalorder %s38, 0
      %s41 = sadd.s32 %s40, 1
      %s42 = scalar_select %p39, %s40, %s41
      %p45 = pneg %p39
      %p46 = scmp.eq.s32.totalorder %s18, 1
      %p47 = por %p45, %p46
      %p48 = scmp.ne.s32.totalorder %s40, %s43
      %p49 = scmp.eq.s32.totalorder %s18, 0
      %p50 = por %p48, %p49
      %p51 = scmp.ne.s32.totalorder %s40, %s43
      %p52 = scmp.eq.s32.totalorder %s23, 1
      %p53 = por %p51, %p52
      %p54 = scmp.ne.s32.totalorder %s43, %s44
      %p55 = scmp.eq.s32.totalorder %s23, 0
      %p56 = por %p54, %p55
      %p57 = scmp.ne.s32.totalorder %s43, %s44
      %p58 = scmp.eq.s32.totalorder %s24, 1
      %p59 = por %p57, %p58
      %p61 = scmp.ne.s32.totalorder %s44, %s60
      %p62 = scmp.eq.s32.totalorder %s24, 0
      %p63 = por %p61, %p62
      %s64 = ssub.s32 %s25, %s37
      %s65 = ssub.s32 %s26, %s33
      %s66 = sor.u32 %s64, %s65
      %p67 = scmp.eq.s32.totalorder %s66, 0
      %s69 = sadd.s32 %s68, 1
      %s70 = scalar_select %p67, %s68, %s69
      %p73 = pneg %p67
      %p74 = scmp.eq.s32.totalorder %s18, 1
      %p75 = por %p73, %p74
      %p76 = scmp.ne.s32.totalorder %s68, %s71
      %p77 = scmp.eq.s32.totalorder %s18, 0
      %p78 = por %p76, %p77
      %p79 = scmp.ne.s32.totalorder %s68, %s71
      %p80 = scmp.eq.s32.totalorder %s23, 1
      %p81 = por %p79, %p80
      %p82 = scmp.ne.s32.totalorder %s71, %s72
      %p83 = scmp.eq.s32.totalorder %s23, 0
      %p84 = por %p82, %p83
      %p85 = scmp.ne.s32.totalorder %s71, %s72
      %p86 = scmp.eq.s32.totalorder %s24, 1
      %p87 = por %p85, %p86
      %p89 = scmp.ne.s32.totalorder %s72, %s88
      %p90 = scmp.eq.s32.totalorder %s24, 0
      %p91 = por %p89, %p90
      %s92 = ssub.s32 %s25, %s37
      %s93 = ssub.s32 %s26, %s33
      %s94 = sor.u32 %s92, %s93
      %p95 = scmp.eq.s32.totalorder %s94, 0
      %s97 = sadd.s32 %s96, 1
      %s98 = scalar_select %p95, %s96, %s97
      %p101 = pneg %p95
      %p102 = scmp.eq.s32.totalorder %s18, 1
      %p103 = por %p101, %p102
      %p104 = scmp.ne.s32.totalorder %s96, %s99
      %p105 = scmp.eq.s32.totalorder %s18, 0
      %p106 = por %p104, %p105
      %p107 = scmp.ne.s32.totalorder %s96, %s99
      %p108 = scmp.eq.s32.totalorder %s23, 1
      %p109 = por %p107, %p108
      %p110 = scmp.ne.s32.totalorder %s99, %s100
      %p111 = scmp.eq.s32.totalorder %s23, 0
      %p112 = por %p110, %p111
      %p113 = scmp.ne.s32.totalorder %s99, %s100
      %p114 = scmp.eq.s32.totalorder %s24, 1
      %p115 = por %p113, %p114
      %p117 = scmp.ne.s32.totalorder %s100, %s116
      %p118 = scmp.eq.s32.totalorder %s24, 0
      %p119 = por %p117, %p118
      %s120 = ssub.s32 %s25, %s37
      %s121 = ssub.s32 %s26, %s33
      %s122 = sor.u32 %s120, %s121
      %p123 = scmp.eq.s32.totalorder %s122, 0
      %s125 = sadd.s32 %s124, 1
      %s126 = scalar_select %p123, %s124, %s125
      %p129 = pneg %p123
      %p130 = scmp.eq.s32.totalorder %s18, 1
      %p131 = por %p129, %p130
      %p132 = scmp.ne.s32.totalorder %s124, %s127
      %p133 = scmp.eq.s32.totalorder %s18, 0
      %p134 = por %p132, %p133
      %p135 = scmp.ne.s32.totalorder %s124, %s127
      %p136 = scmp.eq.s32.totalorder %s23, 1
      %p137 = por %p135, %p136
      %p138 = scmp.ne.s32.totalorder %s127, %s128
      %p139 = scmp.eq.s32.totalorder %s23, 0
      %p140 = por %p138, %p139
      %p141 = scmp.ne.s32.totalorder %s127, %s128
      %p142 = scmp.eq.s32.totalorder %s24, 1
      %p143 = por %p141, %p142
      %p145 = scmp.ne.s32.totalorder %s128, %s144
      %p146 = scmp.eq.s32.totalorder %s24, 0
      %p147 = por %p145, %p146
      %s148 = ssub.s32 %s25, %s37
      %s149 = ssub.s32 %s26, %s33
      %s150 = sor.u32 %s148, %s149
      %p151 = scmp.eq.s32.totalorder %s150, 0
      %s153 = sadd.s32 %s152, 1
      %s154 = scalar_select %p151, %s152, %s153
      %p157 = pneg %p151
      %p158 = scmp.eq.s32.totalorder %s18, 1
      %p159 = por %p157, %p158
      %p160 = scmp.ne.s32.totalorder %s152, %s155
      %p161 = scmp.eq.s32.totalorder %s18, 0
      %p162 = por %p160, %p161
      %p163 = scmp.ne.s32.totalorder %s152, %s155
      %p164 = scmp.eq.s32.totalorder %s23, 1
      %p165 = por %p163, %p164
      %p166 = scmp.ne.s32.totalorder %s155, %s156
      %p167 = scmp.eq.s32.totalorder %s23, 0
      %p168 = por %p166, %p167
      %p169 = scmp.ne.s32.totalorder %s155, %s156
      %p170 = scmp.eq.s32.totalorder %s24, 1
      %p171 = por %p169, %p170
      %p173 = scmp.ne.s32.totalorder %s156, %s172
      %p174 = scmp.eq.s32.totalorder %s24, 0
      %p175 = por %p173, %p174
      %s177 = sadd.s32 %s176, 1
      %p180 = scmp.eq.s32.totalorder %s18, 1
      %p181 = scmp.ne.s32.totalorder %s176, %s178
      %p182 = scmp.eq.s32.totalorder %s18, 0
      %p183 = por %p181, %p182
      %p184 = scmp.ne.s32.totalorder %s176, %s178
      %p185 = scmp.eq.s32.totalorder %s23, 1
      %p186 = por %p184, %p185
      %p187 = scmp.ne.s32.totalorder %s178, %s179
      %p188 = scmp.eq.s32.totalorder %s23, 0
      %p189 = por %p187, %p188
      %p190 = scmp.ne.s32.totalorder %s178, %s179
      %p191 = scmp.eq.s32.totalorder %s24, 1
      %p192 = por %p190, %p191
      %p194 = scmp.ne.s32.totalorder %s179, %s193
      %p195 = scmp.eq.s32.totalorder %s24, 0
      %p196 = por %p194, %p195
      %s197 = ssub.s32 %s25, %s37
      %s198 = ssub.s32 %s26, %s33
      %s199 = sor.u32 %s197, %s198
      %p200 = scmp.eq.s32.totalorder %s199, 0
      %s202 = sadd.s32 %s201, 1
      %s203 = scalar_select %p200, %s201, %s202
      %p206 = pneg %p200
      %p207 = scmp.eq.s32.totalorder %s18, 1
      %p208 = por %p206, %p207
      %p209 = scmp.ne.s32.totalorder %s201, %s204
      %p210 = scmp.eq.s32.totalorder %s18, 0
      %p211 = por %p209, %p210
      %p212 = scmp.ne.s32.totalorder %s201, %s204
      %p213 = scmp.eq.s32.totalorder %s23, 1
      %p214 = por %p212, %p213
      %p215 = scmp.ne.s32.totalorder %s204, %s205
      %p216 = scmp.eq.s32.totalorder %s23, 0
      %p217 = por %p215, %p216
      %p218 = scmp.ne.s32.totalorder %s204, %s205
      %p219 = scmp.eq.s32.totalorder %s24, 1
      %p220 = por %p218, %p219
      %p222 = scmp.ne.s32.totalorder %s205, %s221
      %p223 = scmp.eq.s32.totalorder %s24, 0
      %p224 = por %p222, %p223
      %p225 = scmp.le.s32.totalorder 1, %s18
      %p226 = scmp.lt.s32.totalorder %s18, 3
      %p227 = pnand %p225, %p226
      %p228 = pneg %p227
      // Predicated region
      $region9: #{tpu_custom_call.1} parent=5 // pred_check
        _
      $region10: #{tpu_custom_call.1} parent=5 // pred_check_branch
        %230 = sbr.rel (%p227) target = $region12
      $region11: #{tpu_custom_call.1} parent=5 // pred_region
        %s231 = ssub.s32 %s18, 1
        // Predicated region
        $region13: #{tpu_custom_call.1} parent=11 // pred_check
          %p232 = pneg %p189
        $region14: #{tpu_custom_call.1} parent=11 // pred_check_branch
          %234 = sbr.rel (%p232) target = $region16
        $region15: #{tpu_custom_call.1} parent=11 // pred_region
          _
        $region16: #{tpu_custom_call.1} parent=11 // pred_fallthru
          _
      $region12: #{tpu_custom_call.1} parent=5 // pred_fallthru
        _
      %p235 = scmp.lt.s32.totalorder %s18, 2
      // Predicated region
      $region17: #{tpu_custom_call.1} parent=5 // pred_check
        %p236 = pneg %p235
      $region18: #{tpu_custom_call.1} parent=5 // pred_check_branch
        %238 = sbr.rel (%p236) target = $region20
      $region19: #{tpu_custom_call.1} parent=5 // pred_region
        // Predicated region
        $region21: #{tpu_custom_call.1} parent=19 // pred_check
          %p239 = pneg %p50
        $region22: #{tpu_custom_call.1} parent=19 // pred_check_branch
          %241 = sbr.rel (%p239) target = $region24
        $region23: #{tpu_custom_call.1} parent=19 // pred_region
          %p242 = scmp.lt.s32.totalorder %s25, 1
          %s243 = scalar_select %p242, %s25, 1
          %s244 = smul.addr %s243, 2
          %s245 = smul.addr %s244, 8
          %s246 = scalar_lea.vmem %s0, %s245
        $region24: #{tpu_custom_call.1} parent=19 // pred_fallthru
          _
        // Predicated region
        $region25: #{tpu_custom_call.1} parent=19 // pred_check
          %p247 = pneg %p78
        $region26: #{tpu_custom_call.1} parent=19 // pred_check_branch
          %249 = sbr.rel (%p247) target = $region28
        $region27: #{tpu_custom_call.1} parent=19 // pred_region
          %s250 = smul.u32 2, %s26
          %p251 = scmp.lt.s32.totalorder %s25, 1
          %s252 = scalar_select %p251, %s25, 1
          %p253 = scmp.lt.s32.totalorder %s250, 1
          %s254 = scalar_select %p253, %s250, 1
          %s255 = smul.addr %s252, 2
          %s256 = sadd.s32 %s254, %s255
          %s257 = smul.addr %s256, 8
          %s258 = scalar_lea.vmem %s1, %s257
          %s259 = smul.u32 2, %s26
        $region28: #{tpu_custom_call.1} parent=19 // pred_fallthru
          _
        // Predicated region
        $region29: #{tpu_custom_call.1} parent=19 // pred_check
          %p260 = pneg %p106
        $region30: #{tpu_custom_call.1} parent=19 // pred_check_branch
          %262 = sbr.rel (%p260) target = $region32
        $region31: #{tpu_custom_call.1} parent=19 // pred_region
          %s263 = smul.u32 2, %s26
          %p264 = scmp.lt.s32.totalorder %s25, 1
          %s265 = scalar_select %p264, %s25, 1
          %p266 = scmp.lt.s32.totalorder %s263, 1
          %s267 = scalar_select %p266, %s263, 1
          %s268 = smul.addr %s265, 2
          %s269 = sadd.s32 %s267, %s268
          %s270 = smul.addr %s269, 8
          %s271 = scalar_lea.vmem %s2, %s270
          %s272 = smul.u32 2, %s26
        $region32: #{tpu_custom_call.1} parent=19 // pred_fallthru
          _
        // Predicated region
        $region33: #{tpu_custom_call.1} parent=19 // pred_check
          %p273 = pneg %p134
        $region34: #{tpu_custom_call.1} parent=19 // pred_check_branch
          %275 = sbr.rel (%p273) target = $region36
        $region35: #{tpu_custom_call.1} parent=19 // pred_region
          %s276 = smul.u32 2, %s26
          %p277 = scmp.lt.s32.totalorder %s25, 1
          %s278 = scalar_select %p277, %s25, 1
          %p279 = scmp.lt.s32.totalorder %s276, 1
          %s280 = scalar_select %p279, %s276, 1
          %s281 = smul.addr %s278, 2
          %s282 = sadd.s32 %s280, %s281
          %s283 = smul.addr %s282, 8
          %s284 = scalar_lea.vmem %s3, %s283
          %s285 = smul.u32 2, %s26
        $region36: #{tpu_custom_call.1} parent=19 // pred_fallthru
          _
        // Predicated region
        $region37: #{tpu_custom_call.1} parent=19 // pred_check
          %p286 = pneg %p162
        $region38: #{tpu_custom_call.1} parent=19 // pred_check_branch
          %288 = sbr.rel (%p286) target = $region40
        $region39: #{tpu_custom_call.1} parent=19 // pred_region
          %s289 = sand.u32 %s152, 1
          %s290 = scalar_lea.sflag [#allocation3], %s289
          %s291 = sand.u32 %s152, 1
          %s292 = smul.addr %s291, 16
          %s293 = scalar_lea.vmem [#allocation2], %s292
          %s294 = smul.u32 2, %s26
          %s296 = ssub.s32 256, 256
          %297 = vsyncadd %s290, %s296
          %s298 = smul.addr %s25, 2
          %s299 = sadd.s32 %s294, %s298
          %s300 = smul.addr %s299, 128
          %s301 = scalar_lea.hbm %s4, %s300
          %s302 = sshll.u32 %s293, 4
          %s303 = int_to_ptr.vmem [resolvable:$true] %s302
          %308 = dma.hbm_to_vmem [thread:$0]  %s301, 256, %s303, %s290, 128, 128, 8
        $region40: #{tpu_custom_call.1} parent=19 // pred_fallthru
          _
      $region20: #{tpu_custom_call.1} parent=5 // pred_fallthru
        _
      %p309 = scmp.le.s32.totalorder 1, %s18
      %p310 = scmp.lt.s32.totalorder %s18, 3
      %p311 = pnand %p309, %p310
      %p312 = pneg %p311
      // Predicated region
      $region41: #{tpu_custom_call.1} parent=5 // pred_check
        _
      $region42: #{tpu_custom_call.1} parent=5 // pred_check_branch
        %314 = sbr.rel (%p311) target = $region44
      $region43: #{tpu_custom_call.1} parent=5 // pred_region
        %s315 = ssub.s32 %s18, 1
        %s316 = sand.u32 %s155, 1
        %s317 = scalar_lea.sflag [#allocation3], %s316
        %s318 = sand.u32 %s155, 1
        %s319 = smul.addr %s318, 16
        %s320 = scalar_lea.vmem [#allocation2], %s319
        // Predicated region
        $region45: #{tpu_custom_call.1} parent=43 // pred_check
          %p321 = pneg %p168
        $region46: #{tpu_custom_call.1} parent=43 // pred_check_branch
          %323 = sbr.rel (%p321) target = $region48
        $region47: #{tpu_custom_call.1} parent=43 // pred_region
          %324 = dma.done %s317, 256
        $region48: #{tpu_custom_call.1} parent=43 // pred_fallthru
          _
        %p325 = scmp.lt.s32.totalorder %s27, 1
        %s326 = scalar_select %p325, %s27, 1
        %s327 = smul.addr %s326, 2
        %s328 = smul.addr %s327, 8
        %s329 = scalar_lea.vmem %s0, %s328
        %p330 = pneg %p56
        %p331 = pneg %p53
        %s332 = smul.u32 2, %s28
        %p333 = scmp.lt.s32.totalorder %s27, 1
        %s334 = scalar_select %p333, %s27, 1
        %p335 = scmp.lt.s32.totalorder %s332, 1
        %s336 = scalar_select %p335, %s332, 1
        %s337 = smul.addr %s334, 2
        %s338 = sadd.s32 %s336, %s337
        %s339 = smul.addr %s338, 8
        %s340 = scalar_lea.vmem %s1, %s339
        %p341 = pneg %p84
        %p342 = pneg %p81
        %s343 = smul.u32 2, %s28
        %p344 = scmp.lt.s32.totalorder %s27, 1
        %s345 = scalar_select %p344, %s27, 1
        %p346 = scmp.lt.s32.totalorder %s343, 1
        %s347 = scalar_select %p346, %s343, 1
        %s348 = smul.addr %s345, 2
        %s349 = sadd.s32 %s347, %s348
        %s350 = smul.addr %s349, 8
        %s351 = scalar_lea.vmem %s2, %s350
        %p352 = pneg %p112
        %p353 = pneg %p109
        %s354 = smul.u32 2, %s28
        %p355 = scmp.lt.s32.totalorder %s27, 1
        %s356 = scalar_select %p355, %s27, 1
        %p357 = scmp.lt.s32.totalorder %s354, 1
        %s358 = scalar_select %p357, %s354, 1
        %s359 = smul.addr %s356, 2
        %s360 = sadd.s32 %s358, %s359
        %s361 = smul.addr %s360, 8
        %s362 = scalar_lea.vmem %s3, %s361
        %p363 = pneg %p140
        %p364 = pneg %p137
        %s365 = sand.u32 %s155, 1
        %s366 = scalar_lea.sflag [#allocation3], %s365
        %s367 = sand.u32 %s155, 1
        %s368 = smul.addr %s367, 16
        %s369 = scalar_lea.vmem [#allocation2], %s368
        %p370 = pneg %p168
        %p371 = pneg %p165
        %p372 = pneg %p189
        %p373 = pneg %p186
        %p374 = pneg %p217
        %p375 = pneg %p214
        %s376 = sand.u32 %s204, 1
        %s377 = scalar_lea.sflag [#allocation4], %s376
        %s378 = sand.u32 %s204, 1
        %s379 = smul.addr %s378, 16
        %s380 = scalar_lea.vmem [#allocation5], %s379
        %p381 = scmp.lt.s32.totalorder %s27, 1
        %s382 = scalar_select %p381, %s27, 1
        %s383 = smul.addr %s382, 2
        %s384 = smul.addr %s383, 8
        %s385 = scalar_lea.vmem %s0, %s384
        %s386 = smul.u32 2, %s28
        %p387 = scmp.lt.s32.totalorder %s27, 1
        %s388 = scalar_select %p387, %s27, 1
        %p389 = scmp.lt.s32.totalorder %s386, 1
        %s390 = scalar_select %p389, %s386, 1
        %s391 = smul.addr %s388, 2
        %s392 = sadd.s32 %s390, %s391
        %s393 = smul.addr %s392, 8
        %s394 = scalar_lea.vmem %s1, %s393
        %s395 = smul.u32 2, %s28
        %s396 = smul.u32 2, %s28
        %p397 = scmp.lt.s32.totalorder %s27, 1
        %s398 = scalar_select %p397, %s27, 1
        %p399 = scmp.lt.s32.totalorder %s396, 1
        %s400 = scalar_select %p399, %s396, 1
        %s401 = smul.addr %s398, 2
        %s402 = sadd.s32 %s400, %s401
        %s403 = smul.addr %s402, 8
        %s404 = scalar_lea.vmem %s2, %s403
        %s405 = smul.u32 2, %s28
        %s406 = smul.u32 2, %s28
        %p407 = scmp.lt.s32.totalorder %s27, 1
        %s408 = scalar_select %p407, %s27, 1
        %p409 = scmp.lt.s32.totalorder %s406, 1
        %s410 = scalar_select %p409, %s406, 1
        %s411 = smul.addr %s408, 2
        %s412 = sadd.s32 %s410, %s411
        %s413 = smul.addr %s412, 8
        %s414 = scalar_lea.vmem %s3, %s413
        %s415 = smul.u32 2, %s28
        %s416 = smul.u32 2, %s28
        %s417 = smul.u32 2, %s28
        %v418 = vld [vmem:[%s394] sm:$0xff]
        %v419 = vld [vmem:[%s394 + $0x8] sm:$0xff]
        %v420 = vld [vmem:[%s385] sm:$0xff]
        %v421 = vld [vmem:[%s385 + $0x8] sm:$0xff]
        %v422 = vld [vmem:[%s414] sm:$0xff]
        %v423 = vld [vmem:[%s414 + $0x8] sm:$0xff]
        %v424 = vld [vmem:[%s320] sm:$0xff]
        %v425 = vld [vmem:[%s320 + $0x8] sm:$0xff]
        %427 = vset.pattern.permute.xlu0 0
        %428 = vperm.xlu0 %427, %v422
        %v429 = vpop.permute.xlu0 %428
        %432 = vset.pattern.permute.xlu0 0
        %433 = vperm.xlu0 %432, %v423
        %v434 = vpop.permute.xlu0 %433
        %v436 = vmul.f32 %v429, %v424
        %v437 = vmul.f32 %v434, %v425
        %vm438 = vcmask 130048
        %v440 = vsel %vm438, %v418, 0
        %v443 = vsel %vm438, %v419, 0
        %445 = vmatprep.subr.mxu0 0.0
        %446 = vmatpush1.msra.mxu0 0.0
        %447 = vmatprep.subr.mxu0 0.0
        %448 = vmatpush1.msra.mxu0 0.0
        %449 = vmatprep.subr.mxu0 0.0
        %450 = vmatpush1.msra.mxu0 0.0
        %451 = vmatprep.subr.mxu0 0.0
        %452 = vmatpush1.msra.mxu0 0.0
        %453 = vmatprep.subr.mxu0 0.0
        %454 = vmatpush1.msra.mxu0 0.0
        %455 = vmatprep.subr.mxu0 0.0
        %456 = vmatpush1.msra.mxu0 0.0
        %457 = vmatprep.subr.mxu0 0.0
        %458 = vmatpush1.msra.mxu0 0.0
        %459 = vmatprep.subr.mxu0 0.0
        %460 = vmatpush1.msra.mxu0 0.0
        %461 = vmatprep.subr.mxu0 0.0
        %462 = vmatpush1.msra.mxu0 0.0
        %463 = vmatprep.subr.mxu0 0.0
        %464 = vmatpush1.msra.mxu0 0.0
        %465 = vmatprep.subr.mxu0 0.0
        %466 = vmatpush1.msra.mxu0 0.0
        %467 = vmatprep.subr.mxu0 0.0
        %468 = vmatpush1.msra.mxu0 0.0
        %469 = vmatprep.subr.mxu0 0.0
        %470 = vmatpush1.msra.mxu0 0.0
        %471 = vmatprep.subr.mxu0 0.0
        %472 = vmatpush1.msra.mxu0 0.0
        %473 = vmatprep.subr.mxu0 0.0
        %474 = vmatpush1.msra.mxu0 %v421
        %475 = vmatprep.subr.mxu0 0.0
        %476 = vmatpush1.msra.mxu0 %v420
        %477 = vmatprep.subr.mxu0 0.0
        %478 = vmatpush2.msra.mxu0 0.0
        %479 = vmatprep.subr.mxu0 0.0
        %480 = vmatpush2.msra.mxu0 0.0
        %481 = vmatprep.subr.mxu0 0.0
        %482 = vmatpush2.msra.mxu0 0.0
        %483 = vmatprep.subr.mxu0 0.0
        %484 = vmatpush2.msra.mxu0 0.0
        %485 = vmatprep.subr.mxu0 0.0
        %486 = vmatpush2.msra.mxu0 0.0
        %487 = vmatprep.subr.mxu0 0.0
        %488 = vmatpush2.msra.mxu0 0.0
        %489 = vmatprep.subr.mxu0 0.0
        %490 = vmatpush2.msra.mxu0 0.0
        %491 = vmatprep.subr.mxu0 0.0
        %492 = vmatpush2.msra.mxu0 0.0
        %493 = vmatprep.subr.mxu0 0.0
        %494 = vmatpush2.msra.mxu0 0.0
        %495 = vmatprep.subr.mxu0 0.0
        %496 = vmatpush2.msra.mxu0 0.0
        %497 = vmatprep.subr.mxu0 0.0
        %498 = vmatpush2.msra.mxu0 0.0
        %499 = vmatprep.subr.mxu0 0.0
        %500 = vmatpush2.msra.mxu0 0.0
        %501 = vmatprep.subr.mxu0 0.0
        %502 = vmatpush2.msra.mxu0 0.0
        %503 = vmatprep.subr.mxu0 0.0
        %504 = vmatpush2.msra.mxu0 0.0
        %505 = vmatprep.subr.mxu0 0.0
        %506 = vmatpush2.msra.mxu0 0.0
        %507 = vmatprep.subr.mxu0 0.0
        %508 = vmatpush2.msra.mxu0 0.0
        %509 = vmatprep.mubr.f32.mxu0 0.0
        %510 = vmatmul.mubr.f32.gmra.mxu0 %v440
        %v511 = vpop.f32.mrf.mxu0
        %v512 = vadd.f32 %v436, %v511
        %v513 = vpop.f32.mrf.mxu0
        %514 = vmatprep.mubr.f32.mxu0 0.0
        %515 = vmatmul.mubr.f32.gmra.mxu0 %v443
        %v516 = vpop.f32.mrf.mxu0
        %v517 = vadd.f32 %v437, %v516
        %v518 = vpop.f32.mrf.mxu0
        %519 = vdwg.mxu0
        %v520 = vld [vmem:[%s404] sm:$0xff]
        %v521 = vld [vmem:[%s404 + $0x8] sm:$0xff]
        %523 = vset.pattern.permute.xlu0 0
        %524 = vperm.xlu0 %523, %v520
        %v525 = vpop.permute.xlu0 %524
        %528 = vset.pattern.permute.xlu0 0
        %529 = vperm.xlu0 %528, %v521
        %v530 = vpop.permute.xlu0 %529
        %v532 = vmul.f32 %v512, %v525
        %v533 = vmul.f32 %v517, %v530
        %v534 = vld [vmem:[%s5] sm:$0x1]
        %v536 = vlaneseq
        %v537 = vshrl.u32 %v536, 7
        %v538 = vsub.s32 0, %v537
        %v539 = vrot.slane %v534, %v538
        %v541 = vadd.f32 %v532, %v539
        %v542 = vadd.f32 %v533, %v539
        %543 = vst [vmem:[%s380] sm:$0xff] %v541
        %544 = vst [vmem:[%s380 + $0x8] sm:$0xff] %v542
        %s545 = sand.u32 %s204, 1
        %s546 = scalar_lea.sflag [#allocation4], %s545
        %s547 = sand.u32 %s204, 1
        %s548 = smul.addr %s547, 16
        %s549 = scalar_lea.vmem [#allocation5], %s548
        // Predicated region
        $region49: #{tpu_custom_call.1} parent=43 // pred_check
          %p550 = pneg %p214
        $region50: #{tpu_custom_call.1} parent=43 // pred_check_branch
          %552 = sbr.rel (%p550) target = $region52
        $region51: #{tpu_custom_call.1} parent=43 // pred_region
          %s553 = smul.u32 2, %s28
          %s555 = ssub.s32 256, 256
          %556 = vsyncadd %s546, %s555
          %s557 = smul.addr %s27, 2
          %s558 = sadd.s32 %s553, %s557
          %s559 = smul.addr %s558, 128
          %s560 = scalar_lea.hbm %s6, %s559
          %s561 = sshll.u32 %s549, 4
          %s562 = int_to_ptr.vmem [resolvable:$true] %s561
          %567 = dma.vmem_to_hbm [thread:$0]  %s562, 256, %s560, %s546, 128, 128, 8
        $region52: #{tpu_custom_call.1} parent=43 // pred_fallthru
          _
      $region44: #{tpu_custom_call.1} parent=5 // pred_fallthru
        _
      %p568 = scmp.le.s32.totalorder 2, %s18
      // Predicated region
      $region53: #{tpu_custom_call.1} parent=5 // pred_check
        %p569 = pneg %p568
      $region54: #{tpu_custom_call.1} parent=5 // pred_check_branch
        %571 = sbr.rel (%p569) target = $region56
      $region55: #{tpu_custom_call.1} parent=5 // pred_region
        %s572 = ssub.s32 %s18, 2
        // Predicated region
        $region57: #{tpu_custom_call.1} parent=55 // pred_check
          %p573 = pneg %p220
        $region58: #{tpu_custom_call.1} parent=55 // pred_check_branch
          %575 = sbr.rel (%p573) target = $region60
        $region59: #{tpu_custom_call.1} parent=55 // pred_region
          %s576 = sand.u32 %s205, 1
          %s577 = scalar_lea.sflag [#allocation4], %s576
          %s578 = sand.u32 %s205, 1
          %s579 = smul.addr %s578, 16
          %s580 = scalar_lea.vmem [#allocation5], %s579
          %581 = dma.done %s577, 256
        $region60: #{tpu_custom_call.1} parent=55 // pred_fallthru
          _
      $region56: #{tpu_custom_call.1} parent=5 // pred_fallthru
        _
    $region6: #{tpu_custom_call.1} parent=1 // loop_footer
      %s22 = sadd.s32 1, %s18
    $region7: #{tpu_custom_call.1} parent=1 // loop_footer_branch
      %17 = sbr.rel target = $region3
    $region8: #{tpu_custom_call.1} parent=1 // loop_exit
      _
    %582 = vsyncpa [#allocation3], 1
    %s583 = scalar_lea.sflag [#allocation3], 1
    %584 = vsyncpa %s583, 1
    %585 = vsyncpa [#allocation4], 1
    %s586 = scalar_lea.sflag [#allocation4], 1
    %587 = vsyncpa %s586, 1

</llo_original>
